<compile_context>
chip_gen: v7x
topology: tpu7x:2x2x1
jax: 0.10.0
libtpu: 0.0.40
codegen_flags: <defaults>
</compile_context>

<pallas_src>
import functools

import jax
import jax.numpy as jnp
from jax import lax
from jax.experimental import pallas as pl
from jax.experimental.pallas import tpu as pltpu

BN_EPS = 1e-5
LANE = 128
MIB = 1024 * 1024


def _round_up(x, m):
    return (x + m - 1) // m * m


def _round_down(x, m):
    return x // m * m


def _vmem_capacity_bytes():
    """Physical VMEM capacity of this chip; conservative fallback (v7x/TC)."""
    try:
        return int(pltpu.get_tpu_info().vmem_capacity_bytes)
    except Exception:
        return 64 * MIB


def _fc_block_kernel(x_ref, w_ref, gb_ref, o_ref, *, leaky, inv_n):
    # Linear (no bias): contract x (N, C_in_pad) with the PyTorch-layout
    # weight tile (TN, C_in_pad) over C_in -> (N, TN).  bf16 operands are
    # fed straight to the MXU; accumulation is f32.
    y = lax.dot_general(
        x_ref[...], w_ref[...],
        dimension_numbers=(((1,), (1,)), ((), ())),
        preferred_element_type=jnp.float32,
    )  # (N, TN) f32

    # BatchNorm1d (training mode), fused one-pass stats: two independent
    # reductions over the same tile (no serialized "centered" pass).
    mean = jnp.sum(y, axis=0, keepdims=True) * inv_n            # (1, TN)
    mean_sq = jnp.sum(y * y, axis=0, keepdims=True) * inv_n     # (1, TN)
    var = jnp.maximum(mean_sq - mean * mean, 0.0)               # biased var

    gamma = gb_ref[0:1, :]                                       # (1, TN)
    beta = gb_ref[1:2, :]                                        # (1, TN)
    scale = gamma * lax.rsqrt(var + BN_EPS)                      # fold gamma
    shift = beta - mean * scale

    out = y * scale + shift                                      # single FMA pass
    if leaky:
        out = jnp.where(out >= 0.0, out, 0.2 * out)              # LeakyReLU(0.2)
    else:
        out = jnp.maximum(out, 0.0)                              # ReLU

    o_ref[...] = out.astype(o_ref.dtype)


def fully_connected_block(x, weight, gamma, beta, *, leaky=False, tn=None,
                          mxu_dtype=jnp.bfloat16, keep_padded=False):
    """x: (N, C_in) f32; weight: (C_out, C_in) f32 (PyTorch layout);
    gamma, beta: (C_out,) f32.  Returns (N, C_out) f32 (or (N, C_pad) if
    keep_padded=True)."""
    n, c_in = x.shape
    c_out, c_in_w = weight.shape
    assert c_in_w == c_in, "weight must be (C_out, C_in)"

    xw_bytes = 2 if mxu_dtype == jnp.bfloat16 else 4
    c_in_pad = _round_up(c_in, LANE)              # lane-dense contraction dim
    c128 = _round_up(c_out, LANE)

    # ---- Generation-aware VMEM budget / tile-size caps -----------------
    vmem_capacity = _vmem_capacity_bytes()
    if vmem_capacity >= 96 * MIB:                 # v5e / v6e: 128 MiB, 1 TC
        vmem_cap = 100 * MIB
        tn_cap = 1024
        min_steps = 1
    else:                                         # v7x-like: 64 MiB / TC, 2 TCs
        vmem_cap = 48 * MIB
        tn_cap = 512
        min_steps = 8

    def _footprint(tn_):
        grid_ = _round_up(c_out, tn_) // tn_
        w_bufs = 3 if grid_ >= 3 else 2
        return (2 * n * c_in_pad * xw_bytes        # resident x (double-buffered)
                + w_bufs * tn_ * c_in_pad * xw_bytes   # weight tile buffers
                + 2 * 2 * tn_ * 4                      # packed gamma/beta buffers
                + 2 * n * tn_ * 4                      # output tile buffers
                + 3 * n * tn_ * 4)                     # live (N,TN) f32 temps

    # ---- Channel tile size ---------------------------------------------
    tn_ = tn if tn is not None else tn_cap
    tn_ = max(LANE, _round_down(min(tn_, tn_cap, c128), LANE))
    if min_steps > 1 and c128 >= min_steps * LANE:
        # prefer >= min_steps grid steps so both v7x TensorCores stay busy
        tn_ = min(tn_, max(LANE, _round_down(c128 // min_steps, LANE)))
    while tn_ > LANE and _footprint(tn_) > vmem_cap:
        tn_ = max(LANE, _round_down(tn_ // 2, LANE))

    c_pad = _round_up(c_out, tn_)
    grid_len = c_pad // tn_

    # ---- Padding (exact: zero columns / zero channels) -------------------
    if c_in_pad != c_in:
        x = jnp.pad(x, ((0, 0), (0, c_in_pad - c_in)))
        weight = jnp.pad(weight, ((0, 0), (0, c_in_pad - c_in)))
    if c_pad != c_out:
        weight = jnp.pad(weight, ((0, c_pad - c_out), (0, 0)))
        gamma = jnp.pad(gamma, (0, c_pad - c_out))
        beta = jnp.pad(beta, (0, c_pad - c_out))

    # bf16 streaming to the MXU; BN math stays f32 inside the kernel.
    x_mxu = x.astype(mxu_dtype)
    w_mxu = weight.astype(mxu_dtype)
    gb = jnp.stack([gamma, beta], axis=0).astype(jnp.float32)   # (2, C_pad)

    vmem_bytes = min(max(int(1.25 * _footprint(tn_)), 8 * MIB), vmem_cap)

    cost = pl.CostEstimate(
        flops=2 * n * c_in * c_out,
        transcendentals=0,
        bytes_accessed=(xw_bytes * n * c_in_pad + xw_bytes * c_pad * c_in_pad
                        + 4 * 2 * c_pad + 4 * n * c_pad),
    )

    # Deeper weight pipeline only when there are enough tiles to benefit.
    w_spec_kwargs = {}
    if grid_len >= 3:
        w_spec_kwargs["pipeline_mode"] = pl.Buffered(3)
    w_spec = pl.BlockSpec((tn_, c_in_pad), lambda j: (j, 0), **w_spec_kwargs)

    kernel = functools.partial(_fc_block_kernel, leaky=leaky, inv_n=1.0 / n)

    out = pl.pallas_call(
        kernel,
        out_shape=jax.ShapeDtypeStruct((n, c_pad), jnp.float32),
        grid_spec=pltpu.PrefetchScalarGridSpec(
            num_scalar_prefetch=0,
            grid=(grid_len,),
            in_specs=[
                pl.BlockSpec((n, c_in_pad), lambda j: (0, 0)),  # x resident
                w_spec,                                         # weight tile
                pl.BlockSpec((2, tn_), lambda j: (0, j)),       # gamma/beta
            ],
            out_specs=pl.BlockSpec((n, tn_), lambda j: (0, j)),
        ),
        compiler_params=pltpu.CompilerParams(
            dimension_semantics=("parallel",),   # channel tiles independent
            vmem_limit_bytes=vmem_bytes,
        ),
        cost_estimate=cost,
    )(x_mxu, w_mxu, gb)

    if keep_padded or c_pad == c_out:
        return out
    return out[:, :c_out]


def _reference(x, weight, gamma, beta, *, leaky=False, mxu_dtype=jnp.bfloat16):
    """Pure-JAX reference mirroring the kernel (training-mode BN forward)."""
    if mxu_dtype == jnp.bfloat16:
        xr = x.astype(jnp.bfloat16).astype(jnp.float32)
        wr = weight.astype(jnp.bfloat16).astype(jnp.float32)
    else:
        xr, wr = x, weight
    y = jnp.matmul(xr, wr.T, precision=lax.Precision.HIGHEST)
    mean = jnp.mean(y, axis=0, keepdims=True)
    var = jnp.mean((y - mean) ** 2, axis=0, keepdims=True)
    scale = gamma[None, :] * lax.rsqrt(var + BN_EPS)
    out = y * scale + (beta[None, :] - mean * scale)
    if leaky:
        return jnp.where(out >= 0.0, out, 0.2 * out)
    return jnp.maximum(out, 0.0)


if __name__ == "__main__":
    key = jax.random.PRNGKey(0)
    k_x, k_w, k_g, k_b, k_x2, k_w2 = jax.random.split(key, 6)

    # --- Case 1: lane-aligned shapes, default bf16 streaming, ReLU -------
    batch, channel_in, channel_out = 8, 256, 128
    x = jax.random.normal(k_x, (batch, channel_in), dtype=jnp.float32)
    bound = 1.0 / jnp.sqrt(jnp.float32(channel_in))
    weight = jax.random.uniform(k_w, (channel_out, channel_in),
                                dtype=jnp.float32, minval=-bound, maxval=bound)
    gamma = 1.0 + 0.1 * jax.random.normal(k_g, (channel_out,), dtype=jnp.float32)
    beta = 0.1 * jax.random.normal(k_b, (channel_out,), dtype=jnp.float32)

    out = jax.block_until_ready(
        fully_connected_block(x, weight, gamma, beta, leaky=False))
    ref = _reference(x, weight, gamma, beta, leaky=False, mxu_dtype=jnp.bfloat16)
    assert out.shape == (batch, channel_out)
    assert jnp.allclose(out, ref, atol=2e-3, rtol=2e-3), "bf16 path mismatch"

    # --- Case 2: non-multiple-of-128 channels, f32 path, LeakyReLU -------
    b2, ci2, co2 = 6, 40, 72
    x2 = jax.random.normal(k_x2, (b2, ci2), dtype=jnp.float32)
    bound2 = 1.0 / jnp.sqrt(jnp.float32(ci2))
    w2 = jax.random.uniform(k_w2, (co2, ci2), dtype=jnp.float32,
                            minval=-bound2, maxval=bound2)
    g2 = jnp.ones((co2,), dtype=jnp.float32)
    bt2 = jnp.zeros((co2,), dtype=jnp.float32)

    out2 = jax.block_until_ready(
        fully_connected_block(x2, w2, g2, bt2, leaky=True, mxu_dtype=jnp.float32))
    ref2 = _reference(x2, w2, g2, bt2, leaky=True, mxu_dtype=jnp.float32)
    assert out2.shape == (b2, co2)
    assert jnp.allclose(out2, ref2, atol=1e-3, rtol=1e-3), "f32/leaky path mismatch"

    print("KERNEL_OK")
</pallas_src>

<mosaic_0001>
module attributes {stable_mosaic.version = 11 : i64} {
  func.func @_fc_block_kernel(%arg0: i32, %arg1: memref<8x256xbf16, #tpu.memory_space<vmem>>, %arg2: memref<128x256xbf16, #tpu.memory_space<vmem>>, %arg3: memref<2x128xf32, #tpu.memory_space<vmem>>, %arg4: memref<8x128xf32, #tpu.memory_space<vmem>>) attributes {dimension_semantics = [#tpu.dimension_semantics<parallel>], iteration_bounds = array<i64: 1>, scalar_prefetch = 0 : i64, scratch_operands = 0 : i64, tpu.core_type = #tpu.core_type<tc>, window_params = [{pipeline_mode = #tpu.pipeline_mode<synchronous>, transform_indices = @transform_0, window_bounds = array<i64: 8, 256>}, {transform_indices = @transform_1, window_bounds = array<i64: 128, 256>}, {transform_indices = @transform_2, window_bounds = array<i64: 2, 128>}, {transform_indices = @transform_3, window_bounds = array<i64: 8, 128>}]} {
    %c0 = arith.constant 0 : index
    %c0_0 = arith.constant 0 : index
    %0 = vector.load %arg1[%c0, %c0_0] : memref<8x256xbf16, #tpu.memory_space<vmem>>, vector<8x256xbf16>
    %c0_1 = arith.constant 0 : index
    %c0_2 = arith.constant 0 : index
    %1 = vector.load %arg2[%c0_1, %c0_2] : memref<128x256xbf16, #tpu.memory_space<vmem>>, vector<128x256xbf16>
    %cst = arith.constant dense<0.000000e+00> : vector<8x128xf32>
    %2 = tpu.matmul %0, %1, %cst {dimension_numbers = #tpu.dot_dimension_numbers<[1], [1], [0], [0], [0, 0, 1, 0], [], []>} : vector<8x256xbf16>, vector<128x256xbf16>, vector<8x128xf32> -> vector<8x128xf32>
    %cst_3 = arith.constant dense<0.000000e+00> : vector<128xf32>
    %3 = vector.multi_reduction <add>, %2, %cst_3 [0] : vector<8x128xf32> to vector<128xf32>
    %4 = vector.shape_cast %3 : vector<128xf32> to vector<1x128xf32>
    %cst_4 = arith.constant 1.250000e-01 : f32
    %5 = vector.broadcast %cst_4 : f32 to vector<1x128xf32>
    %6 = arith.mulf %4, %5 : vector<1x128xf32>
    %7 = arith.mulf %2, %2 : vector<8x128xf32>
    %cst_5 = arith.constant dense<0.000000e+00> : vector<128xf32>
    %8 = vector.multi_reduction <add>, %7, %cst_5 [0] : vector<8x128xf32> to vector<128xf32>
    %9 = vector.shape_cast %8 : vector<128xf32> to vector<1x128xf32>
    %cst_6 = arith.constant 1.250000e-01 : f32
    %10 = vector.broadcast %cst_6 : f32 to vector<1x128xf32>
    %11 = arith.mulf %9, %10 : vector<1x128xf32>
    %12 = arith.mulf %6, %6 : vector<1x128xf32>
    %13 = arith.subf %11, %12 : vector<1x128xf32>
    %cst_7 = arith.constant 0.000000e+00 : f32
    %14 = vector.broadcast %cst_7 : f32 to vector<1x128xf32>
    %15 = arith.maximumf %13, %14 : vector<1x128xf32>
    %c0_8 = arith.constant 0 : index
    %c0_9 = arith.constant 0 : index
    %16 = vector.load %arg3[%c0_8, %c0_9] : memref<2x128xf32, #tpu.memory_space<vmem>>, vector<1x128xf32>
    %c1 = arith.constant 1 : index
    %c0_10 = arith.constant 0 : index
    %17 = vector.load %arg3[%c1, %c0_10] : memref<2x128xf32, #tpu.memory_space<vmem>>, vector<1x128xf32>
    %cst_11 = arith.constant 9.99999974E-6 : f32
    %18 = vector.broadcast %cst_11 : f32 to vector<1x128xf32>
    %19 = arith.addf %15, %18 : vector<1x128xf32>
    %20 = math.rsqrt %19 : vector<1x128xf32>
    %21 = arith.mulf %16, %20 : vector<1x128xf32>
    %22 = arith.mulf %6, %21 : vector<1x128xf32>
    %23 = arith.subf %17, %22 : vector<1x128xf32>
    %24 = vector.broadcast %21 : vector<1x128xf32> to vector<8x128xf32>
    %25 = arith.mulf %2, %24 : vector<8x128xf32>
    %26 = vector.broadcast %23 : vector<1x128xf32> to vector<8x128xf32>
    %27 = arith.addf %25, %26 : vector<8x128xf32>
    %cst_12 = arith.constant 0.000000e+00 : f32
    %28 = vector.broadcast %cst_12 : f32 to vector<8x128xf32>
    %29 = arith.maximumf %27, %28 : vector<8x128xf32>
    %c0_13 = arith.constant 0 : index
    %c0_14 = arith.constant 0 : index
    %30 = vector.load %arg4[%c0_13, %c0_14] : memref<8x128xf32, #tpu.memory_space<vmem>>, vector<8x128xf32>
    tpu.vector_store %arg4[%c0_13, %c0_14], %29 {strides = array<i32>} : memref<8x128xf32, #tpu.memory_space<vmem>>, vector<8x128xf32>,
    return
  }
  func.func @transform_0(%arg0: i32) -> (i32, i32) {
    %c0_i32 = arith.constant 0 : i32
    %c0_i32_0 = arith.constant 0 : i32
    %c0_i32_1 = arith.constant 0 : i32
    return %c0_i32, %c0_i32_0 : i32, i32
  }
  func.func @transform_1(%arg0: i32) -> (i32, i32) {
    %c0_i32 = arith.constant 0 : i32
    %c0_i32_0 = arith.constant 0 : i32
    return %arg0, %c0_i32 : i32, i32
  }
  func.func @transform_2(%arg0: i32) -> (i32, i32) {
    %c0_i32 = arith.constant 0 : i32
    %c0_i32_0 = arith.constant 0 : i32
    return %c0_i32, %arg0 : i32, i32
  }
  func.func @transform_3(%arg0: i32) -> (i32, i32) {
    %c0_i32 = arith.constant 0 : i32
    %c0_i32_0 = arith.constant 0 : i32
    return %c0_i32, %arg0 : i32, i32
  }
}

</mosaic_0001>

<llo_original>
// kernel: tpu_custom_call.1
$region0: #{tpu_custom_call.1}
  #allocation0 [shape = 'u32[]', space=smem, size = 0x4, offset = 0x4, fixed_abs, tag = 'smem constant byte address 0x4 - core index']
  #allocation1 [shape = 'u32[144,128]{1,0:T(1,128)}', space=vmem, size = 0x12000, scoped, tag = 'internal scratch']
  %s0 = inlined_call_operand.hbm [shape: bf16[8,256], index: 0, kind: input, shape index: {}]
  %s1 = inlined_call_operand.hbm [shape: bf16[128,256], index: 1, kind: input, shape index: {}]
  %s2 = inlined_call_operand.vmem [shape: f32[2,128], index: 2, kind: input, shape index: {}]
  %s3 = inlined_call_operand.hbm [shape: f32[8,128], index: 3, kind: output, shape index: {}]
  %s4 = sld [smem:[#allocation0]]
  $region30: #{tpu_custom_call.1} parent=0
    _
  %s6 = ssub.s32 1, %s4
  %s7 = scalar_select 0, %s6, %s4
  $region1: #{tpu_custom_call.1} parent=0
    #allocation2 [shape = 'u8[4096]{0}', space=vmem, size = 0x1000, scoped, tag = 'input window, operand 0, single buffered']
    #allocation3 [shape = 's32[1]{0}', space=sflag, size = 0x4, scoped, tag = 'scoped memory for tpu_custom_call.1']
    #allocation4 [shape = 's32[1]{0}', space=sflag, size = 0x4, scoped, tag = 'scoped memory for tpu_custom_call.1']
    #allocation5 [shape = 'u8[65536]{0}', space=vmem, size = 0x10000, scoped, tag = 'input window, operand 1, single buffered']
    #allocation6 [shape = 's32[1]{0}', space=sflag, size = 0x4, scoped, tag = 'scoped memory for tpu_custom_call.1']
    #allocation7 [shape = 'u8[4096]{0}', space=vmem, size = 0x1000, scoped, tag = 'output window, operand 0, single buffered']
    %8 = vsyncpa [#allocation3], 0
    %9 = vsyncpa [#allocation6], 0
    %10 = vsyncpa [#allocation4], 0
    // Predicated region
    $region2: #{tpu_custom_call.1} parent=1 // pred_check
      _
    $region3: #{tpu_custom_call.1} parent=1 // pred_check_branch
      %12 = sbr.rel (0) target = $region5
    $region4: #{tpu_custom_call.1} parent=1 // pred_region
      %s14 = ssub.s32 128, 128
      %15 = vsyncadd [#allocation3], %s14
      %s17 = sshll.u32 [#allocation2], 4
      %s18 = int_to_ptr.vmem [resolvable:$true] %s17
      %20 = dma.hbm_to_vmem [thread:$0]  %s0, 128, %s18, [#allocation3]
    $region5: #{tpu_custom_call.1} parent=1 // pred_fallthru
      _
    // Predicated region
    $region6: #{tpu_custom_call.1} parent=1 // pred_check
      _
    $region7: #{tpu_custom_call.1} parent=1 // pred_check_branch
      %22 = sbr.rel (0) target = $region9
    $region8: #{tpu_custom_call.1} parent=1 // pred_region
      %s24 = ssub.s32 2048, 2048
      %25 = vsyncadd [#allocation6], %s24
      %s26 = sshll.u32 [#allocation5], 4
      %s27 = int_to_ptr.vmem [resolvable:$true] %s26
      %32 = dma.hbm_to_vmem [thread:$0]  %s1, 2048, %s27, [#allocation6], 128, 128, 8
    $region9: #{tpu_custom_call.1} parent=1 // pred_fallthru
      _
    // Predicated region
    $region10: #{tpu_custom_call.1} parent=1 // pred_check
      _
    $region11: #{tpu_custom_call.1} parent=1 // pred_check_branch
      %34 = sbr.rel (0) target = $region13
    $region12: #{tpu_custom_call.1} parent=1 // pred_region
      _
    $region13: #{tpu_custom_call.1} parent=1 // pred_fallthru
      _
    // Predicated region
    $region14: #{tpu_custom_call.1} parent=1 // pred_check
      _
    $region15: #{tpu_custom_call.1} parent=1 // pred_check_branch
      %36 = sbr.rel (0) target = $region17
    $region16: #{tpu_custom_call.1} parent=1 // pred_region
      %37 = dma.done [#allocation3], 128
    $region17: #{tpu_custom_call.1} parent=1 // pred_fallthru
      _
    // Predicated region
    $region18: #{tpu_custom_call.1} parent=1 // pred_check
      _
    $region19: #{tpu_custom_call.1} parent=1 // pred_check_branch
      %39 = sbr.rel (0) target = $region21
    $region20: #{tpu_custom_call.1} parent=1 // pred_region
      %40 = dma.done [#allocation6], 2048
    $region21: #{tpu_custom_call.1} parent=1 // pred_fallthru
      _
    %v42 = vld [vmem:[#allocation2] sm:$0xff]
    %v43 = vld [vmem:[#allocation5] sm:$0xff]
    %v44 = vld [vmem:[#allocation5 + $0x8] sm:$0xff]
    %v45 = vld [vmem:[#allocation5 + $0x10] sm:$0xff]
    %v46 = vld [vmem:[#allocation5 + $0x18] sm:$0xff]
    %v47 = vld [vmem:[#allocation5 + $0x20] sm:$0xff]
    %v48 = vld [vmem:[#allocation5 + $0x28] sm:$0xff]
    %v49 = vld [vmem:[#allocation5 + $0x30] sm:$0xff]
    %v50 = vld [vmem:[#allocation5 + $0x38] sm:$0xff]
    %v51 = vld [vmem:[#allocation5 + $0x40] sm:$0xff]
    %v52 = vld [vmem:[#allocation5 + $0x48] sm:$0xff]
    %v53 = vld [vmem:[#allocation5 + $0x50] sm:$0xff]
    %v54 = vld [vmem:[#allocation5 + $0x58] sm:$0xff]
    %v55 = vld [vmem:[#allocation5 + $0x60] sm:$0xff]
    %v56 = vld [vmem:[#allocation5 + $0x68] sm:$0xff]
    %v57 = vld [vmem:[#allocation5 + $0x70] sm:$0xff]
    %v58 = vld [vmem:[#allocation5 + $0x78] sm:$0xff]
    %v60 = vunpack.c.l.b16 %v42
    %v61 = vunpack.c.h.b16 %v42
    %v62 = vpack.c.b16 %v60, %v60
    %v63 = vpack.c.b16 %v61, %v61
    %v82 = vunpack.c.l.b16 %v43
    %v83 = vunpack.c.h.b16 %v43
    %v84 = vunpack.c.l.b16 %v44
    %v85 = vunpack.c.h.b16 %v44
    %v86 = vunpack.c.l.b16 %v45
    %v87 = vunpack.c.h.b16 %v45
    %v88 = vunpack.c.l.b16 %v46
    %v89 = vunpack.c.h.b16 %v46
    %v90 = vunpack.c.l.b16 %v47
    %v91 = vunpack.c.h.b16 %v47
    %v92 = vunpack.c.l.b16 %v48
    %v93 = vunpack.c.h.b16 %v48
    %v94 = vunpack.c.l.b16 %v49
    %v95 = vunpack.c.h.b16 %v49
    %v96 = vunpack.c.l.b16 %v50
    %v97 = vunpack.c.h.b16 %v50
    %v98 = vunpack.c.l.b16 %v51
    %v99 = vunpack.c.h.b16 %v51
    %v100 = vunpack.c.l.b16 %v52
    %v101 = vunpack.c.h.b16 %v52
    %v102 = vunpack.c.l.b16 %v53
    %v103 = vunpack.c.h.b16 %v53
    %v104 = vunpack.c.l.b16 %v54
    %v105 = vunpack.c.h.b16 %v54
    %v106 = vunpack.c.l.b16 %v55
    %v107 = vunpack.c.h.b16 %v55
    %v108 = vunpack.c.l.b16 %v56
    %v109 = vunpack.c.h.b16 %v56
    %v110 = vunpack.c.l.b16 %v57
    %v111 = vunpack.c.h.b16 %v57
    %v112 = vunpack.c.l.b16 %v58
    %v113 = vunpack.c.h.b16 %v58
    %v114 = vpack.c.b16 %v84, %v82
    %v115 = vpack.c.b16 %v85, %v83
    %v116 = vpack.c.b16 %v88, %v86
    %v117 = vpack.c.b16 %v89, %v87
    %v118 = vpack.c.b16 %v92, %v90
    %v119 = vpack.c.b16 %v93, %v91
    %v120 = vpack.c.b16 %v96, %v94
    %v121 = vpack.c.b16 %v97, %v95
    %v122 = vpack.c.b16 %v100, %v98
    %v123 = vpack.c.b16 %v101, %v99
    %v124 = vpack.c.b16 %v104, %v102
    %v125 = vpack.c.b16 %v105, %v103
    %v126 = vpack.c.b16 %v108, %v106
    %v127 = vpack.c.b16 %v109, %v107
    %v128 = vpack.c.b16 %v112, %v110
    %v129 = vpack.c.b16 %v113, %v111
    %146 = vmatprep.subr.bf16.mxu0 %v115
    %147 = vmatpush1.bf16.xpose.msra.mxu0 %v114
    %148 = vmatprep.subr.bf16.mxu0 %v117
    %149 = vmatpush1.bf16.xpose.msra.mxu0 %v116
    %150 = vmatprep.subr.bf16.mxu0 %v119
    %151 = vmatpush1.bf16.xpose.msra.mxu0 %v118
    %152 = vmatprep.subr.bf16.mxu0 %v121
    %153 = vmatpush1.bf16.xpose.msra.mxu0 %v120
    %154 = vmatprep.subr.bf16.mxu0 %v123
    %155 = vmatpush1.bf16.xpose.msra.mxu0 %v122
    %156 = vmatprep.subr.bf16.mxu0 %v125
    %157 = vmatpush1.bf16.xpose.msra.mxu0 %v124
    %158 = vmatprep.subr.bf16.mxu0 %v127
    %159 = vmatpush1.bf16.xpose.msra.mxu0 %v126
    %160 = vmatprep.subr.bf16.mxu0 %v129
    %161 = vmatpush1.bf16.xpose.msra.mxu0 %v128
    %162 = vmatprep.subr.bf16.mxu0 0
    %163 = vmatpush1.bf16.xpose.msra.mxu0 0
    %164 = vmatprep.subr.bf16.mxu0 0
    %165 = vmatpush1.bf16.xpose.msra.mxu0 0
    %166 = vmatprep.subr.bf16.mxu0 0
    %167 = vmatpush1.bf16.xpose.msra.mxu0 0
    %168 = vmatprep.subr.bf16.mxu0 0
    %169 = vmatpush1.bf16.xpose.msra.mxu0 0
    %170 = vmatprep.subr.bf16.mxu0 0
    %171 = vmatpush1.bf16.xpose.msra.mxu0 0
    %172 = vmatprep.subr.bf16.mxu0 0
    %173 = vmatpush1.bf16.xpose.msra.mxu0 0
    %174 = vmatprep.subr.bf16.mxu0 0
    %175 = vmatpush1.bf16.xpose.msra.mxu0 0
    %176 = vmatprep.subr.bf16.mxu0 0
    %177 = vmatpush1.bf16.xpose.msra.mxu0 0
    %178 = vmatprep.mubr.bf16.mxu0 %v63
    %179 = vmatmul.mubr.bf16.gmra.mrb[0].mxu0 %v62
    %v180 = vpop.f32.mrb[0].mxu0
    %v181 = vadd.f32 0.0, %v180
    %v182 = vpop.f32.mrb[0].mxu0
    %v183 = vpop.f32.mrb[0].mxu0
    %v184 = vpop.f32.mrb[0].mxu0
    %185 = vdwg.mxu0
    %v186 = vrot.slane %v181, 4
    %v187 = vadd.f32 %v181, %v186
    %v188 = vrot.slane %v187, 2
    %v189 = vadd.f32 %v187, %v188
    %v190 = vrot.slane %v189, 1
    %v191 = vadd.f32 %v189, %v190
    %v192 = vmul.f32 %v191, 0.125
    %v193 = vmul.f32 %v181, %v181
    %v194 = vrot.slane %v193, 4
    %v195 = vadd.f32 %v193, %v194
    %v196 = vrot.slane %v195, 2
    %v197 = vadd.f32 %v195, %v196
    %v198 = vrot.slane %v197, 1
    %v199 = vadd.f32 %v197, %v198
    %v200 = vmul.f32 %v199, 0.125
    %v201 = vmul.f32 %v192, %v192
    %v202 = vsub.f32 %v200, %v201
    %v203 = vmax.f32 %v202, 0.0
    %v204 = vld [vmem:[%s2] sm:$0x1]
    %v205 = vld [vmem:[%s2 + $0x1] sm:$0x1]
    %v206 = vadd.f32 %v203, 1e-05
    %v207 = vrsqrt.pop %v206
    %v208 = vmul.f32 %v204, %v207
    %v209 = vmul.f32 %v192, %v208
    %v210 = vsub.f32 %v205, %v209
    %v211 = vlaneseq
    %v212 = vshrl.u32 %v211, 7
    %v213 = vsub.s32 0, %v212
    %v214 = vrot.slane %v208, %v213
    %v215 = vmul.f32 %v181, %v214
    %v216 = vlaneseq
    %v217 = vshrl.u32 %v216, 7
    %v218 = vsub.s32 0, %v217
    %v219 = vrot.slane %v210, %v218
    %v220 = vadd.f32 %v215, %v219
    %v221 = vmax.f32 %v220, 0.0
    %222 = vst [vmem:[#allocation7] sm:$0xff] %v221
    // Predicated region
    $region22: #{tpu_custom_call.1} parent=1 // pred_check
      _
    $region23: #{tpu_custom_call.1} parent=1 // pred_check_branch
      %224 = sbr.rel (0) target = $region25
    $region24: #{tpu_custom_call.1} parent=1 // pred_region
      %s226 = ssub.s32 128, 128
      %227 = vsyncadd [#allocation4], %s226
      %s229 = sshll.u32 [#allocation7], 4
      %s230 = int_to_ptr.vmem [resolvable:$true] %s229
      %232 = dma.vmem_to_hbm [thread:$0]  %s230, 128, %s3, [#allocation4]
    $region25: #{tpu_custom_call.1} parent=1 // pred_fallthru
      _
    // Predicated region
    $region26: #{tpu_custom_call.1} parent=1 // pred_check
      _
    $region27: #{tpu_custom_call.1} parent=1 // pred_check_branch
      %234 = sbr.rel (0) target = $region29
    $region28: #{tpu_custom_call.1} parent=1 // pred_region
      %235 = dma.done [#allocation4], 128
    $region29: #{tpu_custom_call.1} parent=1 // pred_fallthru
      _
    %236 = vsyncpa [#allocation3], 1
    %237 = vsyncpa [#allocation6], 1
    %238 = vsyncpa [#allocation4], 1

</llo_original>
